<compile_context>
chip_gen: v5e
topology: v5e:2x2
jax: 0.10.0
libtpu: 0.0.40
codegen_flags: <defaults>
</compile_context>

<pallas_src>
import numpy as np
import jax
import jax.numpy as jnp
from jax import lax
from jax.experimental import pallas as pl
from jax.experimental.pallas import tpu as pltpu

BN_EPS = 1e-5
KH = KW = 3


# ---------------------------------------------------------------------------
# Kernel
# ---------------------------------------------------------------------------
def _residual_block_kernel(x_ref, w1_ref, w2_ref, rows_ref, o_ref, pad_ref):
    # x_ref block : (1, H, L)   lane-dense activations, L = pack*W*C lanes
    # w*_ref      : (3, PL, L)  block-banded conv weights, PL = pack*(W+2)*C
    # rows_ref    : (5, L)      [s1, t1, s2, t2, b2] per-lane rows
    # pad_ref     : (H+2, PL)   zero-padded activation scratch (VMEM)
    H = x_ref.shape[1]
    L = x_ref.shape[2]

    x = x_ref[0]                                          # (H, L) f32
    rows = rows_ref[...]                                  # (5, L)
    s1, t1 = rows[0:1], rows[1:2]
    s2, t2 = rows[2:3], rows[3:4]
    bres = rows[4:5]

    # Zero the padded-activation scratch once per grid step.  Only the border
    # ring / pad lane-blocks actually need zeros (the interior is fully
    # rewritten before each conv).  Do NOT guard this with program_id == 0:
    # under ("parallel",) megacore each TensorCore owns its own scratch copy.
    pad_ref[...] = jnp.zeros_like(pad_ref)

    def bn_relu_conv(a, s_row, t_row, w_ref):
        # Folded inference-mode BatchNorm + ReLU on the lane-dense layout.
        a = jnp.maximum(a * s_row + t_row, 0.0)           # (H, L)
        # Write the interior of the zero-padded buffer (rows 1..H, lanes
        # 0..L-1; the pad lane-blocks live at lanes L..PL-1 and stay zero).
        pad_ref[pl.ds(1, H), pl.ds(0, L)] = a
        # 3x3 SAME conv as 3 banded matmuls, one per ky row offset.
        # f32 MXU (bf16 cast would be free headroom at larger C/H/W).
        acc = jnp.dot(pad_ref[pl.ds(0, H), :], w_ref[0],
                      preferred_element_type=jnp.float32)
        for ky in range(1, KH):                           # static unroll
            acc = acc + jnp.dot(pad_ref[pl.ds(ky, H), :], w_ref[ky],
                                preferred_element_type=jnp.float32)
        return acc

    # conv1's bias is folded into BN2's shift (wrapper side), so no +b1 here.
    h1 = bn_relu_conv(x, s1, t1, w1_ref)
    h2 = bn_relu_conv(h1, s2, t2, w2_ref)
    # residual add + conv2 bias in a single lane-dense store.
    o_ref[0] = h2 + x + bres


# ---------------------------------------------------------------------------
# One-time (host-side) parameter preparation — NOT in the per-call jitted path
# ---------------------------------------------------------------------------
def _selection_matrices(W, pack):
    """Per-tap selection matrices: padded lane-blocks -> output lane-blocks.

    Physical padded lane-block layout (one grid step holds `pack` images):
      block i*W + w        (i < pack, w < W) -> image i, interior column w
      block pack*W + 2*i / + 2*i + 1         -> image i, left / right zero pad
    Output lane-block layout: block i*W + w -> image i, column w.
    """
    order = np.array(list(range(1, W + 1)) + [0, W + 1])
    mats = []
    for kx in range(KW):
        S = np.eye(W + 2, W, k=-kx, dtype=np.float32)[order, :]     # (W+2, W)
        SP = np.zeros((pack * (W + 2), pack * W), dtype=np.float32)
        for i in range(pack):
            cols = slice(i * W, (i + 1) * W)
            SP[i * W:(i + 1) * W, cols] = S[:W, :]
            SP[pack * W + 2 * i: pack * W + 2 * i + 2, cols] = S[W:, :]
        mats.append(SP)
    return mats


def _band_weights(w_oihw, sel_mats):
    """(C_out, C_in, 3, 3) OIHW -> (3, pack*(W+2)*C_in, pack*W*C_out) banded."""
    w = np.asarray(w_oihw, dtype=np.float32)
    wt = np.transpose(w, (2, 3, 1, 0))                     # (ky, kx, ci, co)
    out = []
    for ky in range(KH):
        M = sum(np.kron(sel_mats[kx], wt[ky, kx]) for kx in range(KW))
        out.append(M)
    return np.stack(out)


def choose_pack(N):
    # Pack 2 images per 128-lane grid step only when the grid stays >= 2 long,
    # so on v7x ("parallel" megacore) neither TensorCore idles.  On v5e/v6e
    # (single TC) packing at N == 2 would also be profitable.
    return 2 if (N % 2 == 0 and N >= 4) else 1


def prepare_residual_block(params, H, W, pack=1):
    """Fold BN (running stats) + conv1 bias and build banded matmul weights.

    Runs once on the host (numpy).  Treat the returned arrays as the stored
    parameter format; do NOT rebuild them per forward call.
    """
    (w1, b1, g1, be1, rm1, rv1, w2, b2, g2, be2, rm2, rv2) = [
        np.asarray(p, dtype=np.float32) for p in params]

    s1 = g1 / np.sqrt(rv1 + BN_EPS)
    t1 = be1 - rm1 * s1
    s2 = g2 / np.sqrt(rv2 + BN_EPS)
    t2 = be2 - rm2 * s2 + s2 * b1            # conv1 bias folded into BN2 shift

    sel = _selection_matrices(W, pack)
    w1f = _band_weights(w1, sel)             # (3, pack*(W+2)*C, pack*W*C)
    w2f = _band_weights(w2, sel)

    def row(v):                              # (C,) -> per-lane row (pack*W*C,)
        return np.tile(v, pack * W)

    rows = np.stack([row(s1), row(t1), row(s2), row(t2), row(b2)])   # (5, L)
    return jnp.asarray(w1f), jnp.asarray(w2f), jnp.asarray(rows)


# ---------------------------------------------------------------------------
# Lane-dense entry point (the hot path) + NCHW plumbing wrapper
# ---------------------------------------------------------------------------
def residual_block_lane_dense(x_ld, w1f, w2f, rows):
    """x_ld: (G, H, L) lane-dense packed activations -> (G, H, L).

    In a full MemNet keep activations in this layout across blocks instead of
    round-tripping through NCHW on every call.
    """
    G, H, L = x_ld.shape
    pad_l = w1f.shape[1]

    img_spec = pl.BlockSpec((1, H, L), lambda n: (n, 0, 0))
    wgt_spec = pl.BlockSpec(tuple(w1f.shape), lambda n: (0, 0, 0))
    rows_spec = pl.BlockSpec(tuple(rows.shape), lambda n: (0, 0))

    grid_spec = pltpu.PrefetchScalarGridSpec(
        num_scalar_prefetch=0,
        grid=(G,),
        in_specs=[img_spec, wgt_spec, wgt_spec, rows_spec],
        out_specs=img_spec,
        # TODO(synk): if H*W*C grows to MiB scale, switch to H-tiling with a
        # 2-row halo rather than raising vmem_limit_bytes (v7x has 64 MiB VMEM).
        scratch_shapes=[pltpu.VMEM((H + 2, pad_l), jnp.float32)],
    )

    return pl.pallas_call(
        _residual_block_kernel,
        out_shape=jax.ShapeDtypeStruct((G, H, L), jnp.float32),
        grid_spec=grid_spec,
        compiler_params=pltpu.CompilerParams(dimension_semantics=("parallel",)),
    )(x_ld, w1f, w2f, rows)


def _pack_nchw(x_nchw, pack):
    N, C, H, W = x_nchw.shape
    x = jnp.transpose(x_nchw, (0, 2, 3, 1)).astype(jnp.float32)      # NHWC
    x = x.reshape(N // pack, pack, H, W, C)
    x = jnp.transpose(x, (0, 2, 1, 3, 4))                            # (G,H,p,W,C)
    return x.reshape(N // pack, H, pack * W * C)


def _unpack_nchw(y_ld, N, C, H, W, pack):
    y = y_ld.reshape(N // pack, H, pack, W, C)
    y = jnp.transpose(y, (0, 2, 1, 3, 4)).reshape(N, H, W, C)
    return jnp.transpose(y, (0, 3, 1, 2))


def forward_nchw(x_nchw, w1f, w2f, rows):
    """NCHW convenience wrapper (pure layout plumbing around the kernel)."""
    N, C, H, W = x_nchw.shape
    pack = rows.shape[1] // (W * C)
    y_ld = residual_block_lane_dense(_pack_nchw(x_nchw, pack), w1f, w2f, rows)
    return _unpack_nchw(y_ld, N, C, H, W, pack)


# ---------------------------------------------------------------------------
# Pure-JAX reference (mirrors the PyTorch module in eval mode)
# ---------------------------------------------------------------------------
def ref_forward(x, params):
    (w1, b1, g1, be1, rm1, rv1, w2, b2, g2, be2, rm2, rv2) = params

    def blk(a, w, b, g, be, rm, rv):
        s = g / jnp.sqrt(rv + BN_EPS)
        ab = (a - rm[None, :, None, None]) * s[None, :, None, None] \
             + be[None, :, None, None]
        ar = jnp.maximum(ab, 0.0)
        y = lax.conv_general_dilated(
            ar, w, window_strides=(1, 1), padding=((1, 1), (1, 1)),
            dimension_numbers=('NCHW', 'OIHW', 'NCHW'))
        return y + b[None, :, None, None]

    out = blk(x, w1, b1, g1, be1, rm1, rv1)
    out = blk(out, w2, b2, g2, be2, rm2, rv2)
    return out + x


if __name__ == "__main__":
    C, H, W = 4, 16, 16
    key = jax.random.PRNGKey(0)
    ks = jax.random.split(key, 13)

    # Conv weights in PyTorch OIHW layout, plus biases.
    w1 = jax.random.normal(ks[1], (C, C, 3, 3), jnp.float32) * 0.1
    b1 = jax.random.normal(ks[2], (C,), jnp.float32) * 0.1
    w2 = jax.random.normal(ks[3], (C, C, 3, 3), jnp.float32) * 0.1
    b2 = jax.random.normal(ks[4], (C,), jnp.float32) * 0.1
    # BatchNorm affine params + (non-trivial) running stats, eval mode.
    g1 = 1.0 + 0.1 * jax.random.normal(ks[5], (C,), jnp.float32)
    be1 = 0.1 * jax.random.normal(ks[6], (C,), jnp.float32)
    g2 = 1.0 + 0.1 * jax.random.normal(ks[7], (C,), jnp.float32)
    be2 = 0.1 * jax.random.normal(ks[8], (C,), jnp.float32)
    rm1 = 0.1 * jax.random.normal(ks[9], (C,), jnp.float32)
    rv1 = 1.0 + 0.3 * jax.random.uniform(ks[10], (C,), jnp.float32)
    rm2 = 0.1 * jax.random.normal(ks[11], (C,), jnp.float32)
    rv2 = 1.0 + 0.3 * jax.random.uniform(ks[12], (C,), jnp.float32)

    params = (w1, b1, g1, be1, rm1, rv1, w2, b2, g2, be2, rm2, rv2)
    fwd = jax.jit(forward_nchw)

    # --- case 1: N=2 (one image per grid step; keeps both v7x TCs busy) -----
    N = 2
    x = jax.random.normal(ks[0], (N, C, H, W), jnp.float32)
    pack = choose_pack(N)                                   # -> 1
    w1f, w2f, rows = prepare_residual_block(params, H, W, pack=pack)
    out = jax.block_until_ready(fwd(x, w1f, w2f, rows))
    ref = jax.block_until_ready(ref_forward(x, params))
    np.testing.assert_allclose(np.asarray(out), np.asarray(ref),
                               rtol=1e-4, atol=1e-4)

    # --- case 2: N=4 -> 2 images packed per 128-lane grid step --------------
    N = 4
    x4 = jax.random.normal(jax.random.PRNGKey(1), (N, C, H, W), jnp.float32)
    pack = choose_pack(N)                                   # -> 2
    w1f, w2f, rows = prepare_residual_block(params, H, W, pack=pack)
    out4 = jax.block_until_ready(fwd(x4, w1f, w2f, rows))
    ref4 = jax.block_until_ready(ref_forward(x4, params))
    np.testing.assert_allclose(np.asarray(out4), np.asarray(ref4),
                               rtol=1e-4, atol=1e-4)

    print("KERNEL_OK")
</pallas_src>

<mosaic_0001>
module attributes {stable_mosaic.version = 11 : i64} {
  func.func @_residual_block_kernel(%arg0: i32, %arg1: memref<1x16x64xf32, #tpu.memory_space<vmem>>, %arg2: memref<3x72x64xf32, #tpu.memory_space<vmem>>, %arg3: memref<3x72x64xf32, #tpu.memory_space<vmem>>, %arg4: memref<5x64xf32, #tpu.memory_space<vmem>>, %arg5: memref<1x16x64xf32, #tpu.memory_space<vmem>>, %arg6: memref<18x72xf32, #tpu.memory_space<vmem>>) attributes {dimension_semantics = [#tpu.dimension_semantics<parallel>], iteration_bounds = array<i64: 2>, scalar_prefetch = 0 : i64, scratch_operands = 1 : i64, tpu.core_type = #tpu.core_type<tc>, window_params = [{transform_indices = @transform_0, window_bounds = array<i64: 1, 16, 64>}, {pipeline_mode = #tpu.pipeline_mode<synchronous>, transform_indices = @transform_1, window_bounds = array<i64: 3, 72, 64>}, {pipeline_mode = #tpu.pipeline_mode<synchronous>, transform_indices = @transform_2, window_bounds = array<i64: 3, 72, 64>}, {pipeline_mode = #tpu.pipeline_mode<synchronous>, transform_indices = @transform_3, window_bounds = array<i64: 5, 64>}, {transform_indices = @transform_4, window_bounds = array<i64: 1, 16, 64>}]} {
    %c0 = arith.constant 0 : index
    %c0_0 = arith.constant 0 : index
    %c0_1 = arith.constant 0 : index
    %0 = vector.load %arg1[%c0, %c0_0, %c0_1] : memref<1x16x64xf32, #tpu.memory_space<vmem>>, vector<1x16x64xf32>
    %1 = vector.shape_cast %0 : vector<1x16x64xf32> to vector<16x64xf32>
    %c0_2 = arith.constant 0 : index
    %c0_3 = arith.constant 0 : index
    %2 = vector.load %arg4[%c0_2, %c0_3] : memref<5x64xf32, #tpu.memory_space<vmem>>, vector<5x64xf32>
    %3 = vector.extract_strided_slice %2 {offsets = [0, 0], sizes = [1, 64], strides = [1, 1]} : vector<5x64xf32> to vector<1x64xf32>
    %4 = vector.extract_strided_slice %2 {offsets = [1, 0], sizes = [1, 64], strides = [1, 1]} : vector<5x64xf32> to vector<1x64xf32>
    %5 = vector.extract_strided_slice %2 {offsets = [2, 0], sizes = [1, 64], strides = [1, 1]} : vector<5x64xf32> to vector<1x64xf32>
    %6 = vector.extract_strided_slice %2 {offsets = [3, 0], sizes = [1, 64], strides = [1, 1]} : vector<5x64xf32> to vector<1x64xf32>
    %7 = vector.extract_strided_slice %2 {offsets = [4, 0], sizes = [1, 64], strides = [1, 1]} : vector<5x64xf32> to vector<1x64xf32>
    %cst = arith.constant 0.000000e+00 : f32
    %8 = vector.broadcast %cst : f32 to vector<18x72xf32>
    %c0_4 = arith.constant 0 : index
    %c0_5 = arith.constant 0 : index
    %9 = vector.load %arg6[%c0_4, %c0_5] : memref<18x72xf32, #tpu.memory_space<vmem>>, vector<18x72xf32>
    tpu.vector_store %arg6[%c0_4, %c0_5], %8 {strides = array<i32>} : memref<18x72xf32, #tpu.memory_space<vmem>>, vector<18x72xf32>,
    %10 = vector.broadcast %3 : vector<1x64xf32> to vector<16x64xf32>
    %11 = arith.mulf %1, %10 : vector<16x64xf32>
    %12 = vector.broadcast %4 : vector<1x64xf32> to vector<16x64xf32>
    %13 = arith.addf %11, %12 : vector<16x64xf32>
    %cst_6 = arith.constant 0.000000e+00 : f32
    %14 = vector.broadcast %cst_6 : f32 to vector<16x64xf32>
    %15 = arith.maximumf %13, %14 : vector<16x64xf32>
    %c1 = arith.constant 1 : index
    %c0_7 = arith.constant 0 : index
    %16 = vector.load %arg6[%c1, %c0_7] : memref<18x72xf32, #tpu.memory_space<vmem>>, vector<16x64xf32>
    tpu.vector_store %arg6[%c1, %c0_7], %15 {strides = array<i32>} : memref<18x72xf32, #tpu.memory_space<vmem>>, vector<16x64xf32>,
    %c0_8 = arith.constant 0 : index
    %c0_9 = arith.constant 0 : index
    %17 = vector.load %arg6[%c0_8, %c0_9] : memref<18x72xf32, #tpu.memory_space<vmem>>, vector<16x72xf32>
    %c0_10 = arith.constant 0 : index
    %c0_11 = arith.constant 0 : index
    %c0_12 = arith.constant 0 : index
    %18 = vector.load %arg2[%c0_10, %c0_11, %c0_12] : memref<3x72x64xf32, #tpu.memory_space<vmem>>, vector<1x72x64xf32>
    %19 = vector.shape_cast %18 : vector<1x72x64xf32> to vector<72x64xf32>
    %cst_13 = arith.constant dense<0.000000e+00> : vector<16x64xf32>
    %20 = tpu.matmul %17, %19, %cst_13 {dimension_numbers = #tpu.dot_dimension_numbers<[1], [0], [0], [1], [0, 0, 1, 1], [], []>} : vector<16x72xf32>, vector<72x64xf32>, vector<16x64xf32> -> vector<16x64xf32>
    %c1_14 = arith.constant 1 : index
    %c0_15 = arith.constant 0 : index
    %21 = vector.load %arg6[%c1_14, %c0_15] : memref<18x72xf32, #tpu.memory_space<vmem>>, vector<16x72xf32>
    %c1_16 = arith.constant 1 : index
    %c0_17 = arith.constant 0 : index
    %c0_18 = arith.constant 0 : index
    %22 = vector.load %arg2[%c1_16, %c0_17, %c0_18] : memref<3x72x64xf32, #tpu.memory_space<vmem>>, vector<1x72x64xf32>
    %23 = vector.shape_cast %22 : vector<1x72x64xf32> to vector<72x64xf32>
    %cst_19 = arith.constant dense<0.000000e+00> : vector<16x64xf32>
    %24 = tpu.matmul %21, %23, %cst_19 {dimension_numbers = #tpu.dot_dimension_numbers<[1], [0], [0], [1], [0, 0, 1, 1], [], []>} : vector<16x72xf32>, vector<72x64xf32>, vector<16x64xf32> -> vector<16x64xf32>
    %25 = arith.addf %20, %24 : vector<16x64xf32>
    %c2 = arith.constant 2 : index
    %c0_20 = arith.constant 0 : index
    %26 = vector.load %arg6[%c2, %c0_20] : memref<18x72xf32, #tpu.memory_space<vmem>>, vector<16x72xf32>
    %c2_21 = arith.constant 2 : index
    %c0_22 = arith.constant 0 : index
    %c0_23 = arith.constant 0 : index
    %27 = vector.load %arg2[%c2_21, %c0_22, %c0_23] : memref<3x72x64xf32, #tpu.memory_space<vmem>>, vector<1x72x64xf32>
    %28 = vector.shape_cast %27 : vector<1x72x64xf32> to vector<72x64xf32>
    %cst_24 = arith.constant dense<0.000000e+00> : vector<16x64xf32>
    %29 = tpu.matmul %26, %28, %cst_24 {dimension_numbers = #tpu.dot_dimension_numbers<[1], [0], [0], [1], [0, 0, 1, 1], [], []>} : vector<16x72xf32>, vector<72x64xf32>, vector<16x64xf32> -> vector<16x64xf32>
    %30 = arith.addf %25, %29 : vector<16x64xf32>
    %31 = vector.broadcast %5 : vector<1x64xf32> to vector<16x64xf32>
    %32 = arith.mulf %30, %31 : vector<16x64xf32>
    %33 = vector.broadcast %6 : vector<1x64xf32> to vector<16x64xf32>
    %34 = arith.addf %32, %33 : vector<16x64xf32>
    %cst_25 = arith.constant 0.000000e+00 : f32
    %35 = vector.broadcast %cst_25 : f32 to vector<16x64xf32>
    %36 = arith.maximumf %34, %35 : vector<16x64xf32>
    %c1_26 = arith.constant 1 : index
    %c0_27 = arith.constant 0 : index
    %37 = vector.load %arg6[%c1_26, %c0_27] : memref<18x72xf32, #tpu.memory_space<vmem>>, vector<16x64xf32>
    tpu.vector_store %arg6[%c1_26, %c0_27], %36 {strides = array<i32>} : memref<18x72xf32, #tpu.memory_space<vmem>>, vector<16x64xf32>,
    %c0_28 = arith.constant 0 : index
    %c0_29 = arith.constant 0 : index
    %38 = vector.load %arg6[%c0_28, %c0_29] : memref<18x72xf32, #tpu.memory_space<vmem>>, vector<16x72xf32>
    %c0_30 = arith.constant 0 : index
    %c0_31 = arith.constant 0 : index
    %c0_32 = arith.constant 0 : index
    %39 = vector.load %arg3[%c0_30, %c0_31, %c0_32] : memref<3x72x64xf32, #tpu.memory_space<vmem>>, vector<1x72x64xf32>
    %40 = vector.shape_cast %39 : vector<1x72x64xf32> to vector<72x64xf32>
    %cst_33 = arith.constant dense<0.000000e+00> : vector<16x64xf32>
    %41 = tpu.matmul %38, %40, %cst_33 {dimension_numbers = #tpu.dot_dimension_numbers<[1], [0], [0], [1], [0, 0, 1, 1], [], []>} : vector<16x72xf32>, vector<72x64xf32>, vector<16x64xf32> -> vector<16x64xf32>
    %c1_34 = arith.constant 1 : index
    %c0_35 = arith.constant 0 : index
    %42 = vector.load %arg6[%c1_34, %c0_35] : memref<18x72xf32, #tpu.memory_space<vmem>>, vector<16x72xf32>
    %c1_36 = arith.constant 1 : index
    %c0_37 = arith.constant 0 : index
    %c0_38 = arith.constant 0 : index
    %43 = vector.load %arg3[%c1_36, %c0_37, %c0_38] : memref<3x72x64xf32, #tpu.memory_space<vmem>>, vector<1x72x64xf32>
    %44 = vector.shape_cast %43 : vector<1x72x64xf32> to vector<72x64xf32>
    %cst_39 = arith.constant dense<0.000000e+00> : vector<16x64xf32>
    %45 = tpu.matmul %42, %44, %cst_39 {dimension_numbers = #tpu.dot_dimension_numbers<[1], [0], [0], [1], [0, 0, 1, 1], [], []>} : vector<16x72xf32>, vector<72x64xf32>, vector<16x64xf32> -> vector<16x64xf32>
    %46 = arith.addf %41, %45 : vector<16x64xf32>
    %c2_40 = arith.constant 2 : index
    %c0_41 = arith.constant 0 : index
    %47 = vector.load %arg6[%c2_40, %c0_41] : memref<18x72xf32, #tpu.memory_space<vmem>>, vector<16x72xf32>
    %c2_42 = arith.constant 2 : index
    %c0_43 = arith.constant 0 : index
    %c0_44 = arith.constant 0 : index
    %48 = vector.load %arg3[%c2_42, %c0_43, %c0_44] : memref<3x72x64xf32, #tpu.memory_space<vmem>>, vector<1x72x64xf32>
    %49 = vector.shape_cast %48 : vector<1x72x64xf32> to vector<72x64xf32>
    %cst_45 = arith.constant dense<0.000000e+00> : vector<16x64xf32>
    %50 = tpu.matmul %47, %49, %cst_45 {dimension_numbers = #tpu.dot_dimension_numbers<[1], [0], [0], [1], [0, 0, 1, 1], [], []>} : vector<16x72xf32>, vector<72x64xf32>, vector<16x64xf32> -> vector<16x64xf32>
    %51 = arith.addf %46, %50 : vector<16x64xf32>
    %52 = arith.addf %51, %1 : vector<16x64xf32>
    %53 = vector.broadcast %7 : vector<1x64xf32> to vector<16x64xf32>
    %54 = arith.addf %52, %53 : vector<16x64xf32>
    %c0_46 = arith.constant 0 : index
    %c0_47 = arith.constant 0 : index
    %c0_48 = arith.constant 0 : index
    %55 = vector.load %arg5[%c0_46, %c0_47, %c0_48] : memref<1x16x64xf32, #tpu.memory_space<vmem>>, vector<1x16x64xf32>
    %56 = vector.shape_cast %55 : vector<1x16x64xf32> to vector<16x64xf32>
    %57 = vector.shape_cast %54 : vector<16x64xf32> to vector<1x16x64xf32>
    tpu.vector_store %arg5[%c0_46, %c0_47, %c0_48], %57 {strides = array<i32>} : memref<1x16x64xf32, #tpu.memory_space<vmem>>, vector<1x16x64xf32>,
    return
  }
  func.func @transform_0(%arg0: i32) -> (i32, i32, i32) {
    %c0_i32 = arith.constant 0 : i32
    %c0_i32_0 = arith.constant 0 : i32
    %c0_i32_1 = arith.constant 0 : i32
    return %arg0, %c0_i32, %c0_i32_0 : i32, i32, i32
  }
  func.func @transform_1(%arg0: i32) -> (i32, i32, i32) {
    %c0_i32 = arith.constant 0 : i32
    %c0_i32_0 = arith.constant 0 : i32
    %c0_i32_1 = arith.constant 0 : i32
    %c0_i32_2 = arith.constant 0 : i32
    return %c0_i32, %c0_i32_0, %c0_i32_1 : i32, i32, i32
  }
  func.func @transform_2(%arg0: i32) -> (i32, i32, i32) {
    %c0_i32 = arith.constant 0 : i32
    %c0_i32_0 = arith.constant 0 : i32
    %c0_i32_1 = arith.constant 0 : i32
    %c0_i32_2 = arith.constant 0 : i32
    return %c0_i32, %c0_i32_0, %c0_i32_1 : i32, i32, i32
  }
  func.func @transform_3(%arg0: i32) -> (i32, i32) {
    %c0_i32 = arith.constant 0 : i32
    %c0_i32_0 = arith.constant 0 : i32
    %c0_i32_1 = arith.constant 0 : i32
    return %c0_i32, %c0_i32_0 : i32, i32
  }
  func.func @transform_4(%arg0: i32) -> (i32, i32, i32) {
    %c0_i32 = arith.constant 0 : i32
    %c0_i32_0 = arith.constant 0 : i32
    %c0_i32_1 = arith.constant 0 : i32
    return %arg0, %c0_i32, %c0_i32_0 : i32, i32, i32
  }
}

</mosaic_0001>

<llo_original>
// kernel: forward_nchw.1
$region0: #{forward_nchw.1}
  #allocation0 [shape = 'u32[]', space=smem, size = 0x4, offset = 0x4, fixed_abs, tag = 'smem constant byte address 0x4 - core index']
  #allocation1 [shape = 'u32[72,128]{1,0:T(1,128)}', space=vmem, size = 0x9000, scoped, tag = 'internal scratch']
  #allocation2 [shape = 'f32[18,72]{1,0:T(8,128)}', space=vmem, size = 0x3000, scoped, tag = 'scratch operand']
  %s0 = inlined_call_operand.vmem [shape: f32[2,16,64], index: 0, kind: input, shape index: {}]
  %s1 = inlined_call_operand.vmem [shape: f32[3,72,64], index: 1, kind: input, shape index: {}]
  %s2 = inlined_call_operand.vmem [shape: f32[3,72,64], index: 2, kind: input, shape index: {}]
  %s3 = inlined_call_operand.vmem [shape: f32[5,64], index: 3, kind: input, shape index: {}]
  %s4 = inlined_call_operand.vmem [shape: f32[2,16,64], index: 4, kind: output, shape index: {}]
  %s5 = sld [smem:[#allocation0]]
  $region49: #{forward_nchw.1} parent=0
    _
  %s7 = ssub.s32 1, %s5
  %s8 = scalar_select 0, %s7, %s5
  loop: start=0, step=1, limit=4
  $region2: #{forward_nchw.1} parent=0 // loop_pre_header
    _
  $region3: #{forward_nchw.1} parent=0 // loop_header
    %s10 = sphi 0, %s14
    %p11 = scmp.ge.s32.totalorder %s10, 4
    %s20 = sphi 0, %s22
    %s23 = sphi 0, %s20
    %s24 = sphi 0, %s23
    %s40 = sphi 0, %s24
    %s44 = sphi 0, %s44
    %s46 = sphi 0, %s44
    %s47 = sphi 0, %s46
    %s61 = sphi 0, %s47
    %s65 = sphi 0, %s65
    %s67 = sphi 0, %s65
    %s68 = sphi 0, %s67
    %s82 = sphi 0, %s68
    %s86 = sphi 0, %s86
    %s88 = sphi 0, %s86
    %s89 = sphi 0, %s88
    %s103 = sphi 0, %s89
    %s109 = sphi 0, %s111
    %s112 = sphi 0, %s109
    %s113 = sphi 0, %s112
    %s129 = sphi 0, %s113
  $region4: #{forward_nchw.1} parent=0 // loop_header_branch
    %13 = sbr.rel (%p11) target = $region8
  $region5: #{forward_nchw.1} parent=0 // loop_body
    %s15 = ssub.s32 %s10, 1
    %s16 = ssub.s32 %s10, 2
    %s17 = sadd.s32 %s10, 1
    %s18 = ssub.s32 %s10, %s17
    %p19 = scmp.eq.s32.totalorder %s18, 0
    %s21 = sadd.s32 %s20, 1
    %s22 = scalar_select %p19, %s20, %s21
    %p25 = pneg %p19
    %p26 = scmp.eq.s32.totalorder %s10, 1
    %p27 = por %p25, %p26
    %p28 = scmp.ne.s32.totalorder %s20, %s23
    %p29 = scmp.eq.s32.totalorder %s10, 0
    %p30 = por %p28, %p29
    %p31 = scmp.ne.s32.totalorder %s20, %s23
    %p32 = scmp.eq.s32.totalorder %s15, 1
    %p33 = por %p31, %p32
    %p34 = scmp.ne.s32.totalorder %s23, %s24
    %p35 = scmp.eq.s32.totalorder %s15, 0
    %p36 = por %p34, %p35
    %p37 = scmp.ne.s32.totalorder %s23, %s24
    %p38 = scmp.eq.s32.totalorder %s16, 1
    %p39 = por %p37, %p38
    %p41 = scmp.ne.s32.totalorder %s24, %s40
    %p42 = scmp.eq.s32.totalorder %s16, 0
    %p43 = por %p41, %p42
    %s45 = sadd.s32 %s44, 1
    %p48 = scmp.eq.s32.totalorder %s10, 1
    %p49 = scmp.ne.s32.totalorder %s44, %s46
    %p50 = scmp.eq.s32.totalorder %s10, 0
    %p51 = por %p49, %p50
    %p52 = scmp.ne.s32.totalorder %s44, %s46
    %p53 = scmp.eq.s32.totalorder %s15, 1
    %p54 = por %p52, %p53
    %p55 = scmp.ne.s32.totalorder %s46, %s47
    %p56 = scmp.eq.s32.totalorder %s15, 0
    %p57 = por %p55, %p56
    %p58 = scmp.ne.s32.totalorder %s46, %s47
    %p59 = scmp.eq.s32.totalorder %s16, 1
    %p60 = por %p58, %p59
    %p62 = scmp.ne.s32.totalorder %s47, %s61
    %p63 = scmp.eq.s32.totalorder %s16, 0
    %p64 = por %p62, %p63
    %s66 = sadd.s32 %s65, 1
    %p69 = scmp.eq.s32.totalorder %s10, 1
    %p70 = scmp.ne.s32.totalorder %s65, %s67
    %p71 = scmp.eq.s32.totalorder %s10, 0
    %p72 = por %p70, %p71
    %p73 = scmp.ne.s32.totalorder %s65, %s67
    %p74 = scmp.eq.s32.totalorder %s15, 1
    %p75 = por %p73, %p74
    %p76 = scmp.ne.s32.totalorder %s67, %s68
    %p77 = scmp.eq.s32.totalorder %s15, 0
    %p78 = por %p76, %p77
    %p79 = scmp.ne.s32.totalorder %s67, %s68
    %p80 = scmp.eq.s32.totalorder %s16, 1
    %p81 = por %p79, %p80
    %p83 = scmp.ne.s32.totalorder %s68, %s82
    %p84 = scmp.eq.s32.totalorder %s16, 0
    %p85 = por %p83, %p84
    %s87 = sadd.s32 %s86, 1
    %p90 = scmp.eq.s32.totalorder %s10, 1
    %p91 = scmp.ne.s32.totalorder %s86, %s88
    %p92 = scmp.eq.s32.totalorder %s10, 0
    %p93 = por %p91, %p92
    %p94 = scmp.ne.s32.totalorder %s86, %s88
    %p95 = scmp.eq.s32.totalorder %s15, 1
    %p96 = por %p94, %p95
    %p97 = scmp.ne.s32.totalorder %s88, %s89
    %p98 = scmp.eq.s32.totalorder %s15, 0
    %p99 = por %p97, %p98
    %p100 = scmp.ne.s32.totalorder %s88, %s89
    %p101 = scmp.eq.s32.totalorder %s16, 1
    %p102 = por %p100, %p101
    %p104 = scmp.ne.s32.totalorder %s89, %s103
    %p105 = scmp.eq.s32.totalorder %s16, 0
    %p106 = por %p104, %p105
    %s107 = ssub.s32 %s10, %s17
    %p108 = scmp.eq.s32.totalorder %s107, 0
    %s110 = sadd.s32 %s109, 1
    %s111 = scalar_select %p108, %s109, %s110
    %p114 = pneg %p108
    %p115 = scmp.eq.s32.totalorder %s10, 1
    %p116 = por %p114, %p115
    %p117 = scmp.ne.s32.totalorder %s109, %s112
    %p118 = scmp.eq.s32.totalorder %s10, 0
    %p119 = por %p117, %p118
    %p120 = scmp.ne.s32.totalorder %s109, %s112
    %p121 = scmp.eq.s32.totalorder %s15, 1
    %p122 = por %p120, %p121
    %p123 = scmp.ne.s32.totalorder %s112, %s113
    %p124 = scmp.eq.s32.totalorder %s15, 0
    %p125 = por %p123, %p124
    %p126 = scmp.ne.s32.totalorder %s112, %s113
    %p127 = scmp.eq.s32.totalorder %s16, 1
    %p128 = por %p126, %p127
    %p130 = scmp.ne.s32.totalorder %s113, %s129
    %p131 = scmp.eq.s32.totalorder %s16, 0
    %p132 = por %p130, %p131
    %p133 = scmp.le.s32.totalorder 1, %s10
    %p134 = scmp.lt.s32.totalorder %s10, 3
    %p135 = pnand %p133, %p134
    %p136 = pneg %p135
    // Predicated region
    $region9: #{forward_nchw.1} parent=5 // pred_check
      _
    $region10: #{forward_nchw.1} parent=5 // pred_check_branch
      %138 = sbr.rel (%p135) target = $region12
    $region11: #{forward_nchw.1} parent=5 // pred_region
      %s139 = ssub.s32 %s10, 1
      // Predicated region
      $region13: #{forward_nchw.1} parent=11 // pred_check
        %p140 = pneg %p57
      $region14: #{forward_nchw.1} parent=11 // pred_check_branch
        %142 = sbr.rel (%p140) target = $region16
      $region15: #{forward_nchw.1} parent=11 // pred_region
        _
      $region16: #{forward_nchw.1} parent=11 // pred_fallthru
        _
      // Predicated region
      $region17: #{forward_nchw.1} parent=11 // pred_check
        %p143 = pneg %p78
      $region18: #{forward_nchw.1} parent=11 // pred_check_branch
        %145 = sbr.rel (%p143) target = $region20
      $region19: #{forward_nchw.1} parent=11 // pred_region
        _
      $region20: #{forward_nchw.1} parent=11 // pred_fallthru
        _
      // Predicated region
      $region21: #{forward_nchw.1} parent=11 // pred_check
        %p146 = pneg %p99
      $region22: #{forward_nchw.1} parent=11 // pred_check_branch
        %148 = sbr.rel (%p146) target = $region24
      $region23: #{forward_nchw.1} parent=11 // pred_region
        _
      $region24: #{forward_nchw.1} parent=11 // pred_fallthru
        _
    $region12: #{forward_nchw.1} parent=5 // pred_fallthru
      _
    %p149 = scmp.lt.s32.totalorder %s10, 2
    // Predicated region
    $region25: #{forward_nchw.1} parent=5 // pred_check
      %p150 = pneg %p149
    $region26: #{forward_nchw.1} parent=5 // pred_check_branch
      %152 = sbr.rel (%p150) target = $region28
    $region27: #{forward_nchw.1} parent=5 // pred_region
      // Predicated region
      $region29: #{forward_nchw.1} parent=27 // pred_check
        %p153 = pneg %p30
      $region30: #{forward_nchw.1} parent=27 // pred_check_branch
        %155 = sbr.rel (%p153) target = $region32
      $region31: #{forward_nchw.1} parent=27 // pred_region
        %p156 = scmp.lt.s32.totalorder %s10, 1
        %s157 = scalar_select %p156, %s10, 1
        %s158 = smul.addr %s157, 2
        %s159 = smul.addr %s158, 8
        %s160 = scalar_lea.vmem %s0, %s159
      $region32: #{forward_nchw.1} parent=27 // pred_fallthru
        _
    $region28: #{forward_nchw.1} parent=5 // pred_fallthru
      _
    %p161 = scmp.le.s32.totalorder 1, %s10
    %p162 = scmp.lt.s32.totalorder %s10, 3
    %p163 = pnand %p161, %p162
    %p164 = pneg %p163
    // Predicated region
    $region33: #{forward_nchw.1} parent=5 // pred_check
      _
    $region34: #{forward_nchw.1} parent=5 // pred_check_branch
      %166 = sbr.rel (%p163) target = $region36
    $region35: #{forward_nchw.1} parent=5 // pred_region
      %s167 = ssub.s32 %s10, 1
      %p168 = scmp.lt.s32.totalorder %s15, 1
      %s169 = scalar_select %p168, %s15, 1
      %s170 = smul.addr %s169, 2
      %s171 = smul.addr %s170, 8
      %s172 = scalar_lea.vmem %s0, %s171
      %p173 = pneg %p36
      %p174 = pneg %p33
      %p175 = pneg %p57
      %p176 = pneg %p54
      %p177 = pneg %p78
      %p178 = pneg %p75
      %p179 = pneg %p99
      %p180 = pneg %p96
      %p181 = pneg %p125
      %p182 = pneg %p122
      %p183 = scmp.lt.s32.totalorder %s15, 1
      %s184 = scalar_select %p183, %s15, 1
      %s185 = smul.addr %s184, 2
      %s186 = smul.addr %s185, 8
      %s187 = scalar_lea.vmem %s4, %s186
      %p188 = scmp.lt.s32.totalorder %s15, 1
      %s189 = scalar_select %p188, %s15, 1
      %s190 = smul.addr %s189, 2
      %s191 = smul.addr %s190, 8
      %s192 = scalar_lea.vmem %s0, %s191
      %p193 = scmp.lt.s32.totalorder %s15, 1
      %s194 = scalar_select %p193, %s15, 1
      %s195 = smul.addr %s194, 2
      %s196 = smul.addr %s195, 8
      %s197 = scalar_lea.vmem %s4, %s196
      %v198 = vld [vmem:[%s192] sm:$0xff]
      %v199 = vld [vmem:[%s192 + $0x8] sm:$0xff]
      %v200 = vld [vmem:[%s3] sm:$0x1f]
      %vm201 = vcmask 588800
      %202 = vst.msk [vmem:[#allocation2] sm:$0xff] %vm201, 0.0
      %203 = vst.msk [vmem:[#allocation2 + $0x8] sm:$0xff] %vm201, 0.0
      %vm204 = vcmask 582656
      %205 = vst.msk [vmem:[#allocation2 + $0x10] sm:$0x3] %vm204, 0.0
      %v206 = vperm.slane %v200, 0
      %v207 = vmul.f32 %v198, %v206
      %v208 = vmul.f32 %v199, %v206
      %v209 = vperm.slane %v200, 1
      %v210 = vadd.f32 %v207, %v209
      %v211 = vadd.f32 %v208, %v209
      %v212 = vmax.f32 %v210, 0.0
      %v213 = vmax.f32 %v211, 0.0
      %vm214 = vcmask 523264
      %215 = vst.msk [vmem:[#allocation2 + $0x1] sm:$0xff] %vm214, %v212
      %216 = vst.msk [vmem:[#allocation2 + $0x9] sm:$0xff] %vm214, %v213
      %v217 = vld [vmem:[#allocation2] sm:$0xff]
      %v218 = vld [vmem:[#allocation2 + $0x8] sm:$0xff]
      %v219 = vld [vmem:[%s1] sm:$0xff]
      %v220 = vld [vmem:[%s1 + $0x8] sm:$0xff]
      %v221 = vld [vmem:[%s1 + $0x10] sm:$0xff]
      %v222 = vld [vmem:[%s1 + $0x18] sm:$0xff]
      %v223 = vld [vmem:[%s1 + $0x20] sm:$0xff]
      %v224 = vld [vmem:[%s1 + $0x28] sm:$0xff]
      %v225 = vld [vmem:[%s1 + $0x30] sm:$0xff]
      %v226 = vld [vmem:[%s1 + $0x38] sm:$0xff]
      %v227 = vld [vmem:[%s1 + $0x40] sm:$0xff]
      %v228 = vld [vmem:[#allocation2 + $0x1] sm:$0xff]
      %v229 = vld [vmem:[#allocation2 + $0x9] sm:$0xff]
      %s230 = scalar_lea.vmem %s1, 72
      %v231 = vld [vmem:[%s230] sm:$0xff]
      %v232 = vld [vmem:[%s230 + $0x8] sm:$0xff]
      %v233 = vld [vmem:[%s230 + $0x10] sm:$0xff]
      %v234 = vld [vmem:[%s230 + $0x18] sm:$0xff]
      %v235 = vld [vmem:[%s230 + $0x20] sm:$0xff]
      %v236 = vld [vmem:[%s230 + $0x28] sm:$0xff]
      %v237 = vld [vmem:[%s230 + $0x30] sm:$0xff]
      %v238 = vld [vmem:[%s230 + $0x38] sm:$0xff]
      %v239 = vld [vmem:[%s230 + $0x40] sm:$0xff]
      %v241 = vsel %vm201, %v228, 0
      %v244 = vsel %vm201, %v229, 0
      %246 = vmatpush.msra.mxu0 0.0
      %247 = vmatpush.msra.mxu0 0.0
      %248 = vmatpush.msra.mxu0 0.0
      %249 = vmatpush.msra.mxu0 0.0
      %250 = vmatpush.msra.mxu0 0.0
      %251 = vmatpush.msra.mxu0 0.0
      %252 = vmatpush.msra.mxu0 0.0
      %253 = vmatpush.msra.mxu0 %v239
      %254 = vmatpush.msra.mxu0 %v238
      %255 = vmatpush.msra.mxu0 %v237
      %256 = vmatpush.msra.mxu0 %v236
      %257 = vmatpush.msra.mxu0 %v235
      %258 = vmatpush.msra.mxu0 %v234
      %259 = vmatpush.msra.mxu0 %v233
      %260 = vmatpush.msra.mxu0 %v232
      %261 = vmatpush.msra.mxu0 %v231
      %262 = vmatmul.f32.gmra.mxu0 %v241
      %v263 = vpop.f32.mrf.mxu0
      %v264 = vadd.f32 0.0, %v263
      %265 = vmatmul.f32.gmra.mxu0 %v244
      %v266 = vpop.f32.mrf.mxu0
      %v267 = vadd.f32 0.0, %v266
      %268 = vdwg.mxu0
      %v270 = vsel %vm201, %v217, 0
      %v273 = vsel %vm201, %v218, 0
      %275 = vmatpush.msra.mxu0 0.0
      %276 = vmatpush.msra.mxu0 0.0
      %277 = vmatpush.msra.mxu0 0.0
      %278 = vmatpush.msra.mxu0 0.0
      %279 = vmatpush.msra.mxu0 0.0
      %280 = vmatpush.msra.mxu0 0.0
      %281 = vmatpush.msra.mxu0 0.0
      %282 = vmatpush.msra.mxu0 %v227
      %283 = vmatpush.msra.mxu0 %v226
      %284 = vmatpush.msra.mxu0 %v225
      %285 = vmatpush.msra.mxu0 %v224
      %286 = vmatpush.msra.mxu0 %v223
      %287 = vmatpush.msra.mxu0 %v222
      %288 = vmatpush.msra.mxu0 %v221
      %289 = vmatpush.msra.mxu0 %v220
      %290 = vmatpush.msra.mxu0 %v219
      %291 = vmatmul.f32.gmra.mxu0 %v270
      %v292 = vpop.f32.mrf.mxu0
      %v293 = vadd.f32 %v264, %v292
      %294 = vmatmul.f32.gmra.mxu0 %v273
      %v295 = vpop.f32.mrf.mxu0
      %v296 = vadd.f32 %v267, %v295
      %297 = vdwg.mxu0
      %v298 = vld [vmem:[#allocation2 + $0x2] sm:$0xff]
      %v299 = vld [vmem:[#allocation2 + $0xa] sm:$0xff]
      %s300 = scalar_lea.vmem %s1, 144
      %v301 = vld [vmem:[%s300] sm:$0xff]
      %v302 = vld [vmem:[%s300 + $0x8] sm:$0xff]
      %v303 = vld [vmem:[%s300 + $0x10] sm:$0xff]
      %v304 = vld [vmem:[%s300 + $0x18] sm:$0xff]
      %v305 = vld [vmem:[%s300 + $0x20] sm:$0xff]
      %v306 = vld [vmem:[%s300 + $0x28] sm:$0xff]
      %v307 = vld [vmem:[%s300 + $0x30] sm:$0xff]
      %v308 = vld [vmem:[%s300 + $0x38] sm:$0xff]
      %v309 = vld [vmem:[%s300 + $0x40] sm:$0xff]
      %v311 = vsel %vm201, %v298, 0
      %v314 = vsel %vm201, %v299, 0
      %316 = vmatpush.msra.mxu0 0.0
      %317 = vmatpush.msra.mxu0 0.0
      %318 = vmatpush.msra.mxu0 0.0
      %319 = vmatpush.msra.mxu0 0.0
      %320 = vmatpush.msra.mxu0 0.0
      %321 = vmatpush.msra.mxu0 0.0
      %322 = vmatpush.msra.mxu0 0.0
      %323 = vmatpush.msra.mxu0 %v309
      %324 = vmatpush.msra.mxu0 %v308
      %325 = vmatpush.msra.mxu0 %v307
      %326 = vmatpush.msra.mxu0 %v306
      %327 = vmatpush.msra.mxu0 %v305
      %328 = vmatpush.msra.mxu0 %v304
      %329 = vmatpush.msra.mxu0 %v303
      %330 = vmatpush.msra.mxu0 %v302
      %331 = vmatpush.msra.mxu0 %v301
      %332 = vmatmul.f32.gmra.mxu0 %v311
      %v333 = vpop.f32.mrf.mxu0
      %v334 = vadd.f32 0.0, %v333
      %335 = vmatmul.f32.gmra.mxu0 %v314
      %v336 = vpop.f32.mrf.mxu0
      %v337 = vadd.f32 0.0, %v336
      %338 = vdwg.mxu0
      %v339 = vadd.f32 %v293, %v334
      %v340 = vadd.f32 %v296, %v337
      %v341 = vperm.slane %v200, 2
      %v342 = vmul.f32 %v339, %v341
      %v343 = vmul.f32 %v340, %v341
      %v344 = vperm.slane %v200, 3
      %v345 = vadd.f32 %v342, %v344
      %v346 = vadd.f32 %v343, %v344
      %v347 = vmax.f32 %v345, 0.0
      %v348 = vmax.f32 %v346, 0.0
      %349 = vst.msk [vmem:[#allocation2 + $0x1] sm:$0xff] %vm214, %v347
      %350 = vst.msk [vmem:[#allocation2 + $0x9] sm:$0xff] %vm214, %v348
      %v351 = vld [vmem:[#allocation2] sm:$0xff]
      %v352 = vld [vmem:[#allocation2 + $0x8] sm:$0xff]
      %v353 = vld [vmem:[%s2] sm:$0xff]
      %v354 = vld [vmem:[%s2 + $0x8] sm:$0xff]
      %v355 = vld [vmem:[%s2 + $0x10] sm:$0xff]
      %v356 = vld [vmem:[%s2 + $0x18] sm:$0xff]
      %v357 = vld [vmem:[%s2 + $0x20] sm:$0xff]
      %v358 = vld [vmem:[%s2 + $0x28] sm:$0xff]
      %v359 = vld [vmem:[%s2 + $0x30] sm:$0xff]
      %v360 = vld [vmem:[%s2 + $0x38] sm:$0xff]
      %v361 = vld [vmem:[%s2 + $0x40] sm:$0xff]
      %v362 = vld [vmem:[#allocation2 + $0x1] sm:$0xff]
      %v363 = vld [vmem:[#allocation2 + $0x9] sm:$0xff]
      %s364 = scalar_lea.vmem %s2, 72
      %v365 = vld [vmem:[%s364] sm:$0xff]
      %v366 = vld [vmem:[%s364 + $0x8] sm:$0xff]
      %v367 = vld [vmem:[%s364 + $0x10] sm:$0xff]
      %v368 = vld [vmem:[%s364 + $0x18] sm:$0xff]
      %v369 = vld [vmem:[%s364 + $0x20] sm:$0xff]
      %v370 = vld [vmem:[%s364 + $0x28] sm:$0xff]
      %v371 = vld [vmem:[%s364 + $0x30] sm:$0xff]
      %v372 = vld [vmem:[%s364 + $0x38] sm:$0xff]
      %v373 = vld [vmem:[%s364 + $0x40] sm:$0xff]
      %v375 = vsel %vm201, %v362, 0
      %v378 = vsel %vm201, %v363, 0
      %380 = vmatpush.msra.mxu0 0.0
      %381 = vmatpush.msra.mxu0 0.0
      %382 = vmatpush.msra.mxu0 0.0
      %383 = vmatpush.msra.mxu0 0.0
      %384 = vmatpush.msra.mxu0 0.0
      %385 = vmatpush.msra.mxu0 0.0
      %386 = vmatpush.msra.mxu0 0.0
      %387 = vmatpush.msra.mxu0 %v373
      %388 = vmatpush.msra.mxu0 %v372
      %389 = vmatpush.msra.mxu0 %v371
      %390 = vmatpush.msra.mxu0 %v370
      %391 = vmatpush.msra.mxu0 %v369
      %392 = vmatpush.msra.mxu0 %v368
      %393 = vmatpush.msra.mxu0 %v367
      %394 = vmatpush.msra.mxu0 %v366
      %395 = vmatpush.msra.mxu0 %v365
      %396 = vmatmul.f32.gmra.mxu0 %v375
      %v397 = vpop.f32.mrf.mxu0
      %v398 = vadd.f32 0.0, %v397
      %399 = vmatmul.f32.gmra.mxu0 %v378
      %v400 = vpop.f32.mrf.mxu0
      %v401 = vadd.f32 0.0, %v400
      %402 = vdwg.mxu0
      %v404 = vsel %vm201, %v351, 0
      %v407 = vsel %vm201, %v352, 0
      %409 = vmatpush.msra.mxu0 0.0
      %410 = vmatpush.msra.mxu0 0.0
      %411 = vmatpush.msra.mxu0 0.0
      %412 = vmatpush.msra.mxu0 0.0
      %413 = vmatpush.msra.mxu0 0.0
      %414 = vmatpush.msra.mxu0 0.0
      %415 = vmatpush.msra.mxu0 0.0
      %416 = vmatpush.msra.mxu0 %v361
      %417 = vmatpush.msra.mxu0 %v360
      %418 = vmatpush.msra.mxu0 %v359
      %419 = vmatpush.msra.mxu0 %v358
      %420 = vmatpush.msra.mxu0 %v357
      %421 = vmatpush.msra.mxu0 %v356
      %422 = vmatpush.msra.mxu0 %v355
      %423 = vmatpush.msra.mxu0 %v354
      %424 = vmatpush.msra.mxu0 %v353
      %425 = vmatmul.f32.gmra.mxu0 %v404
      %v426 = vpop.f32.mrf.mxu0
      %v427 = vadd.f32 %v398, %v426
      %428 = vmatmul.f32.gmra.mxu0 %v407
      %v429 = vpop.f32.mrf.mxu0
      %v430 = vadd.f32 %v401, %v429
      %431 = vdwg.mxu0
      %v432 = vld [vmem:[#allocation2 + $0x2] sm:$0xff]
      %v433 = vld [vmem:[#allocation2 + $0xa] sm:$0xff]
      %s434 = scalar_lea.vmem %s2, 144
      %v435 = vld [vmem:[%s434] sm:$0xff]
      %v436 = vld [vmem:[%s434 + $0x8] sm:$0xff]
      %v437 = vld [vmem:[%s434 + $0x10] sm:$0xff]
      %v438 = vld [vmem:[%s434 + $0x18] sm:$0xff]
      %v439 = vld [vmem:[%s434 + $0x20] sm:$0xff]
      %v440 = vld [vmem:[%s434 + $0x28] sm:$0xff]
      %v441 = vld [vmem:[%s434 + $0x30] sm:$0xff]
      %v442 = vld [vmem:[%s434 + $0x38] sm:$0xff]
      %v443 = vld [vmem:[%s434 + $0x40] sm:$0xff]
      %v445 = vsel %vm201, %v432, 0
      %v448 = vsel %vm201, %v433, 0
      %450 = vmatpush.msra.mxu0 0.0
      %451 = vmatpush.msra.mxu0 0.0
      %452 = vmatpush.msra.mxu0 0.0
      %453 = vmatpush.msra.mxu0 0.0
      %454 = vmatpush.msra.mxu0 0.0
      %455 = vmatpush.msra.mxu0 0.0
      %456 = vmatpush.msra.mxu0 0.0
      %457 = vmatpush.msra.mxu0 %v443
      %458 = vmatpush.msra.mxu0 %v442
      %459 = vmatpush.msra.mxu0 %v441
      %460 = vmatpush.msra.mxu0 %v440
      %461 = vmatpush.msra.mxu0 %v439
      %462 = vmatpush.msra.mxu0 %v438
      %463 = vmatpush.msra.mxu0 %v437
      %464 = vmatpush.msra.mxu0 %v436
      %465 = vmatpush.msra.mxu0 %v435
      %466 = vmatmul.f32.gmra.mxu0 %v445
      %v467 = vpop.f32.mrf.mxu0
      %v468 = vadd.f32 0.0, %v467
      %469 = vmatmul.f32.gmra.mxu0 %v448
      %v470 = vpop.f32.mrf.mxu0
      %v471 = vadd.f32 0.0, %v470
      %472 = vdwg.mxu0
      %v473 = vadd.f32 %v427, %v468
      %v474 = vadd.f32 %v430, %v471
      %v475 = vadd.f32 %v473, %v198
      %v476 = vadd.f32 %v474, %v199
      %v477 = vperm.slane %v200, 4
      %v478 = vadd.f32 %v475, %v477
      %v479 = vadd.f32 %v476, %v477
      %480 = vst.msk [vmem:[%s197] sm:$0xff] %vm214, %v478
      %481 = vst.msk [vmem:[%s197 + $0x8] sm:$0xff] %vm214, %v479
      %p482 = scmp.lt.s32.totalorder %s15, 1
      %s483 = scalar_select %p482, %s15, 1
      %s484 = smul.addr %s483, 2
      %s485 = smul.addr %s484, 8
      %s486 = scalar_lea.vmem %s4, %s485
      // Predicated region
      $region37: #{forward_nchw.1} parent=35 // pred_check
        %p487 = pneg %p122
      $region38: #{forward_nchw.1} parent=35 // pred_check_branch
        %489 = sbr.rel (%p487) target = $region40
      $region39: #{forward_nchw.1} parent=35 // pred_region
        _
      $region40: #{forward_nchw.1} parent=35 // pred_fallthru
        _
    $region36: #{forward_nchw.1} parent=5 // pred_fallthru
      _
    %p490 = scmp.le.s32.totalorder 2, %s10
    // Predicated region
    $region41: #{forward_nchw.1} parent=5 // pred_check
      %p491 = pneg %p490
    $region42: #{forward_nchw.1} parent=5 // pred_check_branch
      %493 = sbr.rel (%p491) target = $region44
    $region43: #{forward_nchw.1} parent=5 // pred_region
      %s494 = ssub.s32 %s10, 2
      // Predicated region
      $region45: #{forward_nchw.1} parent=43 // pred_check
        %p495 = pneg %p128
      $region46: #{forward_nchw.1} parent=43 // pred_check_branch
        %497 = sbr.rel (%p495) target = $region48
      $region47: #{forward_nchw.1} parent=43 // pred_region
        %p498 = scmp.lt.s32.totalorder %s16, 1
        %s499 = scalar_select %p498, %s16, 1
        %s500 = smul.addr %s499, 2
        %s501 = smul.addr %s500, 8
        %s502 = scalar_lea.vmem %s4, %s501
      $region48: #{forward_nchw.1} parent=43 // pred_fallthru
        _
    $region44: #{forward_nchw.1} parent=5 // pred_fallthru
      _
  $region6: #{forward_nchw.1} parent=0 // loop_footer
    %s14 = sadd.s32 1, %s10
  $region7: #{forward_nchw.1} parent=0 // loop_footer_branch
    %9 = sbr.rel target = $region3
  $region8: #{forward_nchw.1} parent=0 // loop_exit
    _

</llo_original>
